<compile_context>
chip_gen: v5e
topology: v5e:2x2
jax: 0.10.0
libtpu: 0.0.40
codegen_flags: <defaults>
</compile_context>

<pallas_src>
import functools

import jax
import jax.numpy as jnp
from jax.experimental import pallas as pl
from jax.experimental.pallas import tpu as pltpu


# ---------------------------------------------------------------------------
# Kernel
# ---------------------------------------------------------------------------
def bin_packing_kernel(x_ref,
                       wih_e_ref, b_e_ref,
                       whh_d_ref, wsum_d_ref, b_d_ref,
                       wfc_ref, bfc_ref,
                       out_ref,
                       *, hidden_size, max_len):
    """All weights use reordered gate columns [i, f, o | g]; biases pre-folded.

    x_ref:     (B_pad, input_size)
    wih_e_ref: (input_size, 4H)       b_e_ref: (1, 4H)
    whh_d_ref: (H, 4H)   wsum_d_ref: (H, 4H)   b_d_ref: (1, 4H)
    wfc_ref:   (H, O_pad)             bfc_ref: (1, O_pad)
    out_ref:   (max_len * B_pad, O_pad)   rows ordered (t, b)
    """
    H = hidden_size
    x = x_ref[...]
    B = x.shape[0]

    # ---- encoder: single timestep with h0 = c0 = 0 (whh_e term is exactly 0,
    #      f*c term is exactly 0) ----
    g_e = (jnp.dot(x, wih_e_ref[...], preferred_element_type=jnp.float32)
           + b_e_ref[...])
    sig_e = jax.nn.sigmoid(g_e[:, :3 * H])            # contiguous i,f,o block
    i_e = sig_e[:, 0 * H:1 * H]
    o_e = sig_e[:, 2 * H:3 * H]
    g_gate_e = jnp.tanh(g_e[:, 3 * H:4 * H])
    c = i_e * g_gate_e
    h = o_e * jnp.tanh(c)

    # ---- decoder: max_len unrolled steps. decoder_input_t == h_t for t >= 1,
    #      so gates = h @ (wih_d + whh_d) + b; step 0 has decoder_input = 0. ----
    whh_d = whh_d_ref[...]
    wsum_d = wsum_d_ref[...]
    b_d = jnp.broadcast_to(b_d_ref[...], (B, 4 * H))   # hoisted broadcast

    hs = []                                            # per-step h kept in vregs
    for t in range(max_len):
        w = whh_d if t == 0 else wsum_d
        gates = jnp.dot(h, w, preferred_element_type=jnp.float32) + b_d
        sig = jax.nn.sigmoid(gates[:, :3 * H])         # one contiguous sigmoid
        i = sig[:, 0 * H:1 * H]
        f = sig[:, 1 * H:2 * H]
        o = sig[:, 2 * H:3 * H]
        g = jnp.tanh(gates[:, 3 * H:4 * H])
        c = f * c + i * g
        h = o * jnp.tanh(c)
        hs.append(h)

    # ---- single fused FC over all collected hidden states + ONE lane-dense
    #      unmasked store of the whole (max_len*B, O_pad) slab ----
    hs_all = jnp.concatenate(hs, axis=0)               # (max_len*B, H), (t,b) order
    out_ref[...] = (jnp.dot(hs_all, wfc_ref[...],
                            preferred_element_type=jnp.float32)
                    + bfc_ref[...])


# ---------------------------------------------------------------------------
# Wrapper
# ---------------------------------------------------------------------------
def bin_packing_forward(x, kparams, *, hidden_size, output_size, max_len):
    B = x.shape[0]
    H = hidden_size

    # Sublane-pad batch to a multiple of 8 so gates are whole (8,128) vregs.
    B_pad = ((B + 7) // 8) * 8
    if B_pad != B:
        x = jnp.pad(x, ((0, B_pad - B), (0, 0)))

    O_pad = kparams["wfc"].shape[1]                    # lane-dense (>=128)

    kernel = functools.partial(bin_packing_kernel,
                               hidden_size=H, max_len=max_len)
    vmem = pl.BlockSpec(memory_space=pltpu.MemorySpace.VMEM)

    out_flat = pl.pallas_call(
        kernel,
        out_shape=jax.ShapeDtypeStruct((max_len * B_pad, O_pad), jnp.float32),
        in_specs=[vmem] * 8,
        out_specs=vmem,
        compiler_params=pltpu.CompilerParams(vmem_limit_bytes=32 * 1024 * 1024),
    )(x,
      kparams["wih_e"], kparams["b_e"],
      kparams["whh_d"], kparams["wsum_d"], kparams["b_d"],
      kparams["wfc"], kparams["bfc"])

    # rows are ordered (t, b); slice away batch/output padding, go batch-first.
    out = out_flat.reshape(max_len, B_pad, O_pad)[:, :B, :output_size]
    return jnp.transpose(out, (1, 0, 2))               # (B, max_len, O)


# ---------------------------------------------------------------------------
# Pure-JAX reference (faithful PyTorch math, canonical i,f,g,o gate order)
# ---------------------------------------------------------------------------
def _lstm_cell(x, h, c, w_ih, w_hh, b, H):
    gates = (jnp.dot(x, w_ih, preferred_element_type=jnp.float32)
             + jnp.dot(h, w_hh, preferred_element_type=jnp.float32)
             + b)
    i = jax.nn.sigmoid(gates[:, 0 * H:1 * H])
    f = jax.nn.sigmoid(gates[:, 1 * H:2 * H])
    g = jnp.tanh(gates[:, 2 * H:3 * H])
    o = jax.nn.sigmoid(gates[:, 3 * H:4 * H])
    c_new = f * c + i * g
    h_new = o * jnp.tanh(c_new)
    return h_new, c_new


def reference_forward(x, params, *, hidden_size, max_len):
    H = hidden_size
    B = x.shape[0]
    h = jnp.zeros((B, H), jnp.float32)
    c = jnp.zeros((B, H), jnp.float32)
    h, c = _lstm_cell(x, h, c, params["wih_e"], params["whh_e"],
                      params["b_e"], H)
    dec_in = jnp.zeros((B, H), jnp.float32)
    outs = []
    for _ in range(max_len):
        h, c = _lstm_cell(dec_in, h, c, params["wih_d"], params["whh_d"],
                          params["b_d"], H)
        dec_in = h
        outs.append(jnp.dot(h, params["wfc"]) + params["bfc"])
    return jnp.stack(outs, axis=1)


# ---------------------------------------------------------------------------
# Parameter construction + one-time kernel-layout preprocessing
# ---------------------------------------------------------------------------
def make_params(key, input_size, hidden_size, output_size):
    H = hidden_size
    k = 1.0 / jnp.sqrt(jnp.float32(H))
    keys = jax.random.split(key, 10)

    def u(kk, shape):
        return jax.random.uniform(kk, shape, jnp.float32, minval=-k, maxval=k)

    # PyTorch shapes: weight_ih (4H, in), weight_hh (4H, H), biases (4H,)
    wih_e = u(keys[0], (4 * H, input_size))
    whh_e = u(keys[1], (4 * H, H))
    bih_e = u(keys[2], (4 * H,))
    bhh_e = u(keys[3], (4 * H,))
    wih_d = u(keys[4], (4 * H, H))
    whh_d = u(keys[5], (4 * H, H))
    bih_d = u(keys[6], (4 * H,))
    bhh_d = u(keys[7], (4 * H,))
    wfc = jax.random.uniform(keys[8], (output_size, H), jnp.float32,
                             minval=-k, maxval=k)
    bfc = jax.random.uniform(keys[9], (output_size,), jnp.float32,
                             minval=-k, maxval=k)

    # Canonical layout (i,f,g,o columns) for the reference: transpose for the
    # (B, in) @ (in, 4H) hot path; fold the two biases.
    return dict(
        wih_e=wih_e.T, whh_e=whh_e.T, b_e=(bih_e + bhh_e).reshape(1, 4 * H),
        wih_d=wih_d.T, whh_d=whh_d.T, b_d=(bih_d + bhh_d).reshape(1, 4 * H),
        wfc=wfc.T, bfc=bfc.reshape(1, output_size),
    )


def prepare_kernel_params(params, hidden_size, output_size):
    """One-time prep: gate reorder [i,f,o|g], wsum_d fold, lane-dense FC pad."""
    H = hidden_size
    perm = jnp.concatenate([
        jnp.arange(0 * H, 1 * H),   # i
        jnp.arange(1 * H, 2 * H),   # f
        jnp.arange(3 * H, 4 * H),   # o
        jnp.arange(2 * H, 3 * H),   # g
    ])

    def reorder_w(w):   # (in, 4H) -> permuted columns
        return w[:, perm]

    def reorder_b(b):   # (1, 4H)
        return b[:, perm]

    O_pad = max(128, ((output_size + 127) // 128) * 128)
    wfc_pad = jnp.zeros((H, O_pad), jnp.float32).at[:, :output_size].set(
        params["wfc"])
    bfc_pad = jnp.zeros((1, O_pad), jnp.float32).at[:, :output_size].set(
        params["bfc"])

    return dict(
        wih_e=reorder_w(params["wih_e"]),
        b_e=reorder_b(params["b_e"]),
        whh_d=reorder_w(params["whh_d"]),
        wsum_d=reorder_w(params["wih_d"] + params["whh_d"]),
        b_d=reorder_b(params["b_d"]),
        wfc=wfc_pad,
        bfc=bfc_pad,
    )


if __name__ == "__main__":
    B, INPUT_SIZE, HIDDEN, OUTPUT_SIZE, MAX_LEN = 2, 4, 32, 8, 8

    key = jax.random.PRNGKey(0)
    k_x, k_p = jax.random.split(key)
    x = jax.random.normal(k_x, (B, INPUT_SIZE), jnp.float32)
    params = make_params(k_p, INPUT_SIZE, HIDDEN, OUTPUT_SIZE)
    kparams = jax.tree_util.tree_map(
        jax.block_until_ready,
        prepare_kernel_params(params, HIDDEN, OUTPUT_SIZE))

    out = bin_packing_forward(x, kparams, hidden_size=HIDDEN,
                              output_size=OUTPUT_SIZE, max_len=MAX_LEN)
    out = jax.block_until_ready(out)

    ref = reference_forward(x, params, hidden_size=HIDDEN, max_len=MAX_LEN)
    assert out.shape == (B, MAX_LEN, OUTPUT_SIZE), out.shape
    assert jnp.allclose(out, ref, atol=1e-5, rtol=1e-5), "mismatch vs reference"
    print("KERNEL_OK")
</pallas_src>

<mosaic_0001>
module attributes {stable_mosaic.version = 11 : i64} {
  func.func @bin_packing_kernel(%arg0: memref<8x4xf32, #tpu.memory_space<vmem>>, %arg1: memref<4x128xf32, #tpu.memory_space<vmem>>, %arg2: memref<1x128xf32, #tpu.memory_space<vmem>>, %arg3: memref<32x128xf32, #tpu.memory_space<vmem>>, %arg4: memref<32x128xf32, #tpu.memory_space<vmem>>, %arg5: memref<1x128xf32, #tpu.memory_space<vmem>>, %arg6: memref<32x128xf32, #tpu.memory_space<vmem>>, %arg7: memref<1x128xf32, #tpu.memory_space<vmem>>, %arg8: memref<64x128xf32, #tpu.memory_space<vmem>>) attributes {dimension_semantics = [], scalar_prefetch = 0 : i64, scratch_operands = 0 : i64, tpu.core_type = #tpu.core_type<tc>} {
    %c0 = arith.constant 0 : index
    %c0_0 = arith.constant 0 : index
    %0 = vector.load %arg0[%c0, %c0_0] : memref<8x4xf32, #tpu.memory_space<vmem>>, vector<8x4xf32>
    %c0_1 = arith.constant 0 : index
    %c0_2 = arith.constant 0 : index
    %1 = vector.load %arg1[%c0_1, %c0_2] : memref<4x128xf32, #tpu.memory_space<vmem>>, vector<4x128xf32>
    %cst = arith.constant dense<0.000000e+00> : vector<8x128xf32>
    %2 = tpu.matmul %0, %1, %cst {dimension_numbers = #tpu.dot_dimension_numbers<[1], [0], [0], [1], [0, 0, 1, 1], [], []>} : vector<8x4xf32>, vector<4x128xf32>, vector<8x128xf32> -> vector<8x128xf32>
    %c0_3 = arith.constant 0 : index
    %c0_4 = arith.constant 0 : index
    %3 = vector.load %arg2[%c0_3, %c0_4] : memref<1x128xf32, #tpu.memory_space<vmem>>, vector<1x128xf32>
    %4 = vector.broadcast %3 : vector<1x128xf32> to vector<8x128xf32>
    %5 = arith.addf %2, %4 : vector<8x128xf32>
    %6 = vector.extract_strided_slice %5 {offsets = [0, 0], sizes = [8, 96], strides = [1, 1]} : vector<8x128xf32> to vector<8x96xf32>
    %7 = arith.negf %6 : vector<8x96xf32>
    %8 = math.exp %7 : vector<8x96xf32>
    %cst_5 = arith.constant 1.000000e+00 : f32
    %9 = vector.broadcast %cst_5 : f32 to vector<8x96xf32>
    %10 = arith.addf %9, %8 : vector<8x96xf32>
    %11 = arith.divf %9, %10 : vector<8x96xf32>
    %12 = vector.extract_strided_slice %11 {offsets = [0, 0], sizes = [8, 32], strides = [1, 1]} : vector<8x96xf32> to vector<8x32xf32>
    %13 = vector.extract_strided_slice %11 {offsets = [0, 64], sizes = [8, 32], strides = [1, 1]} : vector<8x96xf32> to vector<8x32xf32>
    %14 = vector.extract_strided_slice %5 {offsets = [0, 96], sizes = [8, 32], strides = [1, 1]} : vector<8x128xf32> to vector<8x32xf32>
    %15 = math.tanh %14 : vector<8x32xf32>
    %16 = arith.mulf %12, %15 : vector<8x32xf32>
    %17 = math.tanh %16 : vector<8x32xf32>
    %18 = arith.mulf %13, %17 : vector<8x32xf32>
    %c0_6 = arith.constant 0 : index
    %c0_7 = arith.constant 0 : index
    %19 = vector.load %arg3[%c0_6, %c0_7] : memref<32x128xf32, #tpu.memory_space<vmem>>, vector<32x128xf32>
    %c0_8 = arith.constant 0 : index
    %c0_9 = arith.constant 0 : index
    %20 = vector.load %arg4[%c0_8, %c0_9] : memref<32x128xf32, #tpu.memory_space<vmem>>, vector<32x128xf32>
    %c0_10 = arith.constant 0 : index
    %c0_11 = arith.constant 0 : index
    %21 = vector.load %arg5[%c0_10, %c0_11] : memref<1x128xf32, #tpu.memory_space<vmem>>, vector<1x128xf32>
    %22 = vector.shape_cast %21 : vector<1x128xf32> to vector<1x128xf32>
    %23 = vector.broadcast %22 : vector<1x128xf32> to vector<8x128xf32>
    %cst_12 = arith.constant dense<0.000000e+00> : vector<8x128xf32>
    %24 = tpu.matmul %18, %19, %cst_12 {dimension_numbers = #tpu.dot_dimension_numbers<[1], [0], [0], [1], [0, 0, 1, 1], [], []>} : vector<8x32xf32>, vector<32x128xf32>, vector<8x128xf32> -> vector<8x128xf32>
    %25 = arith.addf %24, %23 : vector<8x128xf32>
    %26 = vector.extract_strided_slice %25 {offsets = [0, 0], sizes = [8, 96], strides = [1, 1]} : vector<8x128xf32> to vector<8x96xf32>
    %27 = arith.negf %26 : vector<8x96xf32>
    %28 = math.exp %27 : vector<8x96xf32>
    %cst_13 = arith.constant 1.000000e+00 : f32
    %29 = vector.broadcast %cst_13 : f32 to vector<8x96xf32>
    %30 = arith.addf %29, %28 : vector<8x96xf32>
    %31 = arith.divf %29, %30 : vector<8x96xf32>
    %32 = vector.extract_strided_slice %31 {offsets = [0, 0], sizes = [8, 32], strides = [1, 1]} : vector<8x96xf32> to vector<8x32xf32>
    %33 = vector.extract_strided_slice %31 {offsets = [0, 32], sizes = [8, 32], strides = [1, 1]} : vector<8x96xf32> to vector<8x32xf32>
    %34 = vector.extract_strided_slice %31 {offsets = [0, 64], sizes = [8, 32], strides = [1, 1]} : vector<8x96xf32> to vector<8x32xf32>
    %35 = vector.extract_strided_slice %25 {offsets = [0, 96], sizes = [8, 32], strides = [1, 1]} : vector<8x128xf32> to vector<8x32xf32>
    %36 = math.tanh %35 : vector<8x32xf32>
    %37 = arith.mulf %33, %16 : vector<8x32xf32>
    %38 = arith.mulf %32, %36 : vector<8x32xf32>
    %39 = arith.addf %37, %38 : vector<8x32xf32>
    %40 = math.tanh %39 : vector<8x32xf32>
    %41 = arith.mulf %34, %40 : vector<8x32xf32>
    %cst_14 = arith.constant dense<0.000000e+00> : vector<8x128xf32>
    %42 = tpu.matmul %41, %20, %cst_14 {dimension_numbers = #tpu.dot_dimension_numbers<[1], [0], [0], [1], [0, 0, 1, 1], [], []>} : vector<8x32xf32>, vector<32x128xf32>, vector<8x128xf32> -> vector<8x128xf32>
    %43 = arith.addf %42, %23 : vector<8x128xf32>
    %44 = vector.extract_strided_slice %43 {offsets = [0, 0], sizes = [8, 96], strides = [1, 1]} : vector<8x128xf32> to vector<8x96xf32>
    %45 = arith.negf %44 : vector<8x96xf32>
    %46 = math.exp %45 : vector<8x96xf32>
    %cst_15 = arith.constant 1.000000e+00 : f32
    %47 = vector.broadcast %cst_15 : f32 to vector<8x96xf32>
    %48 = arith.addf %47, %46 : vector<8x96xf32>
    %49 = arith.divf %47, %48 : vector<8x96xf32>
    %50 = vector.extract_strided_slice %49 {offsets = [0, 0], sizes = [8, 32], strides = [1, 1]} : vector<8x96xf32> to vector<8x32xf32>
    %51 = vector.extract_strided_slice %49 {offsets = [0, 32], sizes = [8, 32], strides = [1, 1]} : vector<8x96xf32> to vector<8x32xf32>
    %52 = vector.extract_strided_slice %49 {offsets = [0, 64], sizes = [8, 32], strides = [1, 1]} : vector<8x96xf32> to vector<8x32xf32>
    %53 = vector.extract_strided_slice %43 {offsets = [0, 96], sizes = [8, 32], strides = [1, 1]} : vector<8x128xf32> to vector<8x32xf32>
    %54 = math.tanh %53 : vector<8x32xf32>
    %55 = arith.mulf %51, %39 : vector<8x32xf32>
    %56 = arith.mulf %50, %54 : vector<8x32xf32>
    %57 = arith.addf %55, %56 : vector<8x32xf32>
    %58 = math.tanh %57 : vector<8x32xf32>
    %59 = arith.mulf %52, %58 : vector<8x32xf32>
    %cst_16 = arith.constant dense<0.000000e+00> : vector<8x128xf32>
    %60 = tpu.matmul %59, %20, %cst_16 {dimension_numbers = #tpu.dot_dimension_numbers<[1], [0], [0], [1], [0, 0, 1, 1], [], []>} : vector<8x32xf32>, vector<32x128xf32>, vector<8x128xf32> -> vector<8x128xf32>
    %61 = arith.addf %60, %23 : vector<8x128xf32>
    %62 = vector.extract_strided_slice %61 {offsets = [0, 0], sizes = [8, 96], strides = [1, 1]} : vector<8x128xf32> to vector<8x96xf32>
    %63 = arith.negf %62 : vector<8x96xf32>
    %64 = math.exp %63 : vector<8x96xf32>
    %cst_17 = arith.constant 1.000000e+00 : f32
    %65 = vector.broadcast %cst_17 : f32 to vector<8x96xf32>
    %66 = arith.addf %65, %64 : vector<8x96xf32>
    %67 = arith.divf %65, %66 : vector<8x96xf32>
    %68 = vector.extract_strided_slice %67 {offsets = [0, 0], sizes = [8, 32], strides = [1, 1]} : vector<8x96xf32> to vector<8x32xf32>
    %69 = vector.extract_strided_slice %67 {offsets = [0, 32], sizes = [8, 32], strides = [1, 1]} : vector<8x96xf32> to vector<8x32xf32>
    %70 = vector.extract_strided_slice %67 {offsets = [0, 64], sizes = [8, 32], strides = [1, 1]} : vector<8x96xf32> to vector<8x32xf32>
    %71 = vector.extract_strided_slice %61 {offsets = [0, 96], sizes = [8, 32], strides = [1, 1]} : vector<8x128xf32> to vector<8x32xf32>
    %72 = math.tanh %71 : vector<8x32xf32>
    %73 = arith.mulf %69, %57 : vector<8x32xf32>
    %74 = arith.mulf %68, %72 : vector<8x32xf32>
    %75 = arith.addf %73, %74 : vector<8x32xf32>
    %76 = math.tanh %75 : vector<8x32xf32>
    %77 = arith.mulf %70, %76 : vector<8x32xf32>
    %cst_18 = arith.constant dense<0.000000e+00> : vector<8x128xf32>
    %78 = tpu.matmul %77, %20, %cst_18 {dimension_numbers = #tpu.dot_dimension_numbers<[1], [0], [0], [1], [0, 0, 1, 1], [], []>} : vector<8x32xf32>, vector<32x128xf32>, vector<8x128xf32> -> vector<8x128xf32>
    %79 = arith.addf %78, %23 : vector<8x128xf32>
    %80 = vector.extract_strided_slice %79 {offsets = [0, 0], sizes = [8, 96], strides = [1, 1]} : vector<8x128xf32> to vector<8x96xf32>
    %81 = arith.negf %80 : vector<8x96xf32>
    %82 = math.exp %81 : vector<8x96xf32>
    %cst_19 = arith.constant 1.000000e+00 : f32
    %83 = vector.broadcast %cst_19 : f32 to vector<8x96xf32>
    %84 = arith.addf %83, %82 : vector<8x96xf32>
    %85 = arith.divf %83, %84 : vector<8x96xf32>
    %86 = vector.extract_strided_slice %85 {offsets = [0, 0], sizes = [8, 32], strides = [1, 1]} : vector<8x96xf32> to vector<8x32xf32>
    %87 = vector.extract_strided_slice %85 {offsets = [0, 32], sizes = [8, 32], strides = [1, 1]} : vector<8x96xf32> to vector<8x32xf32>
    %88 = vector.extract_strided_slice %85 {offsets = [0, 64], sizes = [8, 32], strides = [1, 1]} : vector<8x96xf32> to vector<8x32xf32>
    %89 = vector.extract_strided_slice %79 {offsets = [0, 96], sizes = [8, 32], strides = [1, 1]} : vector<8x128xf32> to vector<8x32xf32>
    %90 = math.tanh %89 : vector<8x32xf32>
    %91 = arith.mulf %87, %75 : vector<8x32xf32>
    %92 = arith.mulf %86, %90 : vector<8x32xf32>
    %93 = arith.addf %91, %92 : vector<8x32xf32>
    %94 = math.tanh %93 : vector<8x32xf32>
    %95 = arith.mulf %88, %94 : vector<8x32xf32>
    %cst_20 = arith.constant dense<0.000000e+00> : vector<8x128xf32>
    %96 = tpu.matmul %95, %20, %cst_20 {dimension_numbers = #tpu.dot_dimension_numbers<[1], [0], [0], [1], [0, 0, 1, 1], [], []>} : vector<8x32xf32>, vector<32x128xf32>, vector<8x128xf32> -> vector<8x128xf32>
    %97 = arith.addf %96, %23 : vector<8x128xf32>
    %98 = vector.extract_strided_slice %97 {offsets = [0, 0], sizes = [8, 96], strides = [1, 1]} : vector<8x128xf32> to vector<8x96xf32>
    %99 = arith.negf %98 : vector<8x96xf32>
    %100 = math.exp %99 : vector<8x96xf32>
    %cst_21 = arith.constant 1.000000e+00 : f32
    %101 = vector.broadcast %cst_21 : f32 to vector<8x96xf32>
    %102 = arith.addf %101, %100 : vector<8x96xf32>
    %103 = arith.divf %101, %102 : vector<8x96xf32>
    %104 = vector.extract_strided_slice %103 {offsets = [0, 0], sizes = [8, 32], strides = [1, 1]} : vector<8x96xf32> to vector<8x32xf32>
    %105 = vector.extract_strided_slice %103 {offsets = [0, 32], sizes = [8, 32], strides = [1, 1]} : vector<8x96xf32> to vector<8x32xf32>
    %106 = vector.extract_strided_slice %103 {offsets = [0, 64], sizes = [8, 32], strides = [1, 1]} : vector<8x96xf32> to vector<8x32xf32>
    %107 = vector.extract_strided_slice %97 {offsets = [0, 96], sizes = [8, 32], strides = [1, 1]} : vector<8x128xf32> to vector<8x32xf32>
    %108 = math.tanh %107 : vector<8x32xf32>
    %109 = arith.mulf %105, %93 : vector<8x32xf32>
    %110 = arith.mulf %104, %108 : vector<8x32xf32>
    %111 = arith.addf %109, %110 : vector<8x32xf32>
    %112 = math.tanh %111 : vector<8x32xf32>
    %113 = arith.mulf %106, %112 : vector<8x32xf32>
    %cst_22 = arith.constant dense<0.000000e+00> : vector<8x128xf32>
    %114 = tpu.matmul %113, %20, %cst_22 {dimension_numbers = #tpu.dot_dimension_numbers<[1], [0], [0], [1], [0, 0, 1, 1], [], []>} : vector<8x32xf32>, vector<32x128xf32>, vector<8x128xf32> -> vector<8x128xf32>
    %115 = arith.addf %114, %23 : vector<8x128xf32>
    %116 = vector.extract_strided_slice %115 {offsets = [0, 0], sizes = [8, 96], strides = [1, 1]} : vector<8x128xf32> to vector<8x96xf32>
    %117 = arith.negf %116 : vector<8x96xf32>
    %118 = math.exp %117 : vector<8x96xf32>
    %cst_23 = arith.constant 1.000000e+00 : f32
    %119 = vector.broadcast %cst_23 : f32 to vector<8x96xf32>
    %120 = arith.addf %119, %118 : vector<8x96xf32>
    %121 = arith.divf %119, %120 : vector<8x96xf32>
    %122 = vector.extract_strided_slice %121 {offsets = [0, 0], sizes = [8, 32], strides = [1, 1]} : vector<8x96xf32> to vector<8x32xf32>
    %123 = vector.extract_strided_slice %121 {offsets = [0, 32], sizes = [8, 32], strides = [1, 1]} : vector<8x96xf32> to vector<8x32xf32>
    %124 = vector.extract_strided_slice %121 {offsets = [0, 64], sizes = [8, 32], strides = [1, 1]} : vector<8x96xf32> to vector<8x32xf32>
    %125 = vector.extract_strided_slice %115 {offsets = [0, 96], sizes = [8, 32], strides = [1, 1]} : vector<8x128xf32> to vector<8x32xf32>
    %126 = math.tanh %125 : vector<8x32xf32>
    %127 = arith.mulf %123, %111 : vector<8x32xf32>
    %128 = arith.mulf %122, %126 : vector<8x32xf32>
    %129 = arith.addf %127, %128 : vector<8x32xf32>
    %130 = math.tanh %129 : vector<8x32xf32>
    %131 = arith.mulf %124, %130 : vector<8x32xf32>
    %cst_24 = arith.constant dense<0.000000e+00> : vector<8x128xf32>
    %132 = tpu.matmul %131, %20, %cst_24 {dimension_numbers = #tpu.dot_dimension_numbers<[1], [0], [0], [1], [0, 0, 1, 1], [], []>} : vector<8x32xf32>, vector<32x128xf32>, vector<8x128xf32> -> vector<8x128xf32>
    %133 = arith.addf %132, %23 : vector<8x128xf32>
    %134 = vector.extract_strided_slice %133 {offsets = [0, 0], sizes = [8, 96], strides = [1, 1]} : vector<8x128xf32> to vector<8x96xf32>
    %135 = arith.negf %134 : vector<8x96xf32>
    %136 = math.exp %135 : vector<8x96xf32>
    %cst_25 = arith.constant 1.000000e+00 : f32
    %137 = vector.broadcast %cst_25 : f32 to vector<8x96xf32>
    %138 = arith.addf %137, %136 : vector<8x96xf32>
    %139 = arith.divf %137, %138 : vector<8x96xf32>
    %140 = vector.extract_strided_slice %139 {offsets = [0, 0], sizes = [8, 32], strides = [1, 1]} : vector<8x96xf32> to vector<8x32xf32>
    %141 = vector.extract_strided_slice %139 {offsets = [0, 32], sizes = [8, 32], strides = [1, 1]} : vector<8x96xf32> to vector<8x32xf32>
    %142 = vector.extract_strided_slice %139 {offsets = [0, 64], sizes = [8, 32], strides = [1, 1]} : vector<8x96xf32> to vector<8x32xf32>
    %143 = vector.extract_strided_slice %133 {offsets = [0, 96], sizes = [8, 32], strides = [1, 1]} : vector<8x128xf32> to vector<8x32xf32>
    %144 = math.tanh %143 : vector<8x32xf32>
    %145 = arith.mulf %141, %129 : vector<8x32xf32>
    %146 = arith.mulf %140, %144 : vector<8x32xf32>
    %147 = arith.addf %145, %146 : vector<8x32xf32>
    %148 = math.tanh %147 : vector<8x32xf32>
    %149 = arith.mulf %142, %148 : vector<8x32xf32>
    %cst_26 = arith.constant dense<0.000000e+00> : vector<8x128xf32>
    %150 = tpu.matmul %149, %20, %cst_26 {dimension_numbers = #tpu.dot_dimension_numbers<[1], [0], [0], [1], [0, 0, 1, 1], [], []>} : vector<8x32xf32>, vector<32x128xf32>, vector<8x128xf32> -> vector<8x128xf32>
    %151 = arith.addf %150, %23 : vector<8x128xf32>
    %152 = vector.extract_strided_slice %151 {offsets = [0, 0], sizes = [8, 96], strides = [1, 1]} : vector<8x128xf32> to vector<8x96xf32>
    %153 = arith.negf %152 : vector<8x96xf32>
    %154 = math.exp %153 : vector<8x96xf32>
    %cst_27 = arith.constant 1.000000e+00 : f32
    %155 = vector.broadcast %cst_27 : f32 to vector<8x96xf32>
    %156 = arith.addf %155, %154 : vector<8x96xf32>
    %157 = arith.divf %155, %156 : vector<8x96xf32>
    %158 = vector.extract_strided_slice %157 {offsets = [0, 0], sizes = [8, 32], strides = [1, 1]} : vector<8x96xf32> to vector<8x32xf32>
    %159 = vector.extract_strided_slice %157 {offsets = [0, 32], sizes = [8, 32], strides = [1, 1]} : vector<8x96xf32> to vector<8x32xf32>
    %160 = vector.extract_strided_slice %157 {offsets = [0, 64], sizes = [8, 32], strides = [1, 1]} : vector<8x96xf32> to vector<8x32xf32>
    %161 = vector.extract_strided_slice %151 {offsets = [0, 96], sizes = [8, 32], strides = [1, 1]} : vector<8x128xf32> to vector<8x32xf32>
    %162 = math.tanh %161 : vector<8x32xf32>
    %163 = arith.mulf %159, %147 : vector<8x32xf32>
    %164 = arith.mulf %158, %162 : vector<8x32xf32>
    %165 = arith.addf %163, %164 : vector<8x32xf32>
    %166 = math.tanh %165 : vector<8x32xf32>
    %167 = arith.mulf %160, %166 : vector<8x32xf32>
    %168 = tpu.concatenate %41, %59, %77, %95, %113, %131, %149, %167 in 0 : vector<8x32xf32>, vector<8x32xf32>, vector<8x32xf32>, vector<8x32xf32>, vector<8x32xf32>, vector<8x32xf32>, vector<8x32xf32>, vector<8x32xf32> -> vector<64x32xf32>
    %c0_28 = arith.constant 0 : index
    %c0_29 = arith.constant 0 : index
    %169 = vector.load %arg6[%c0_28, %c0_29] : memref<32x128xf32, #tpu.memory_space<vmem>>, vector<32x128xf32>
    %cst_30 = arith.constant dense<0.000000e+00> : vector<64x128xf32>
    %170 = tpu.matmul %168, %169, %cst_30 {dimension_numbers = #tpu.dot_dimension_numbers<[1], [0], [0], [1], [0, 0, 1, 1], [], []>} : vector<64x32xf32>, vector<32x128xf32>, vector<64x128xf32> -> vector<64x128xf32>
    %c0_31 = arith.constant 0 : index
    %c0_32 = arith.constant 0 : index
    %171 = vector.load %arg7[%c0_31, %c0_32] : memref<1x128xf32, #tpu.memory_space<vmem>>, vector<1x128xf32>
    %172 = vector.broadcast %171 : vector<1x128xf32> to vector<64x128xf32>
    %173 = arith.addf %170, %172 : vector<64x128xf32>
    %c0_33 = arith.constant 0 : index
    %c0_34 = arith.constant 0 : index
    %174 = vector.load %arg8[%c0_33, %c0_34] : memref<64x128xf32, #tpu.memory_space<vmem>>, vector<64x128xf32>
    tpu.vector_store %arg8[%c0_33, %c0_34], %173 {strides = array<i32>} : memref<64x128xf32, #tpu.memory_space<vmem>>, vector<64x128xf32>,
    return
  }
}

</mosaic_0001>

<llo_original>
// kernel: tpu_custom_call.1
$region0: #{tpu_custom_call.1}
  #allocation0 [shape = 'u32[]', space=smem, size = 0x4, offset = 0x4, fixed_abs, tag = 'smem constant byte address 0x4 - core index']
  #allocation1 [shape = 'u32[72,128]{1,0:T(1,128)}', space=vmem, size = 0x9000, scoped, tag = 'internal scratch']
  %s0 = inlined_call_operand.vmem [shape: f32[8,4], index: 0, kind: input, shape index: {}]
  %s1 = inlined_call_operand.vmem [shape: f32[4,128], index: 1, kind: input, shape index: {}]
  %s2 = inlined_call_operand.vmem [shape: f32[1,128], index: 2, kind: input, shape index: {}]
  %s3 = inlined_call_operand.hbm [shape: f32[32,128], index: 3, kind: input, shape index: {}]
  %s4 = inlined_call_operand.hbm [shape: f32[32,128], index: 4, kind: input, shape index: {}]
  %s5 = inlined_call_operand.vmem [shape: f32[1,128], index: 5, kind: input, shape index: {}]
  %s6 = inlined_call_operand.hbm [shape: f32[32,128], index: 6, kind: input, shape index: {}]
  %s7 = inlined_call_operand.vmem [shape: f32[1,128], index: 7, kind: input, shape index: {}]
  %s8 = inlined_call_operand.hbm [shape: f32[64,128], index: 8, kind: output, shape index: {}]
  %s9 = sld [smem:[#allocation0]]
  $region54: #{tpu_custom_call.1} parent=0
    _
  %s11 = ssub.s32 1, %s9
  %s12 = scalar_select 0, %s11, %s9
  $region1: #{tpu_custom_call.1} parent=0
    #allocation2 [shape = 'u8[16384]{0}', space=vmem, size = 0x4000, scoped, tag = 'input window, operand 3, single buffered']
    #allocation3 [shape = 's32[1]{0}', space=sflag, size = 0x4, scoped, tag = 'scoped memory for tpu_custom_call.1']
    #allocation4 [shape = 's32[1]{0}', space=sflag, size = 0x4, scoped, tag = 'scoped memory for tpu_custom_call.1']
    #allocation5 [shape = 'u8[16384]{0}', space=vmem, size = 0x4000, scoped, tag = 'input window, operand 4, single buffered']
    #allocation6 [shape = 's32[1]{0}', space=sflag, size = 0x4, scoped, tag = 'scoped memory for tpu_custom_call.1']
    #allocation7 [shape = 'u8[16384]{0}', space=vmem, size = 0x4000, scoped, tag = 'input window, operand 6, single buffered']
    #allocation8 [shape = 'u8[32768]{0}', space=vmem, size = 0x8000, scoped, tag = 'output window, operand 0, single buffered']
    %13 = vsyncpa [#allocation3], 0
    %14 = vsyncpa [#allocation6], 0
    %15 = vsyncpa [#allocation4], 0
    // Predicated region
    $region2: #{tpu_custom_call.1} parent=1 // pred_check
      _
    $region3: #{tpu_custom_call.1} parent=1 // pred_check_branch
      %17 = sbr.rel (0) target = $region5
    $region4: #{tpu_custom_call.1} parent=1 // pred_region
      _
    $region5: #{tpu_custom_call.1} parent=1 // pred_fallthru
      _
    // Predicated region
    $region6: #{tpu_custom_call.1} parent=1 // pred_check
      _
    $region7: #{tpu_custom_call.1} parent=1 // pred_check_branch
      %19 = sbr.rel (0) target = $region9
    $region8: #{tpu_custom_call.1} parent=1 // pred_region
      _
    $region9: #{tpu_custom_call.1} parent=1 // pred_fallthru
      _
    // Predicated region
    $region10: #{tpu_custom_call.1} parent=1 // pred_check
      _
    $region11: #{tpu_custom_call.1} parent=1 // pred_check_branch
      %21 = sbr.rel (0) target = $region13
    $region12: #{tpu_custom_call.1} parent=1 // pred_region
      _
    $region13: #{tpu_custom_call.1} parent=1 // pred_fallthru
      _
    // Predicated region
    $region14: #{tpu_custom_call.1} parent=1 // pred_check
      _
    $region15: #{tpu_custom_call.1} parent=1 // pred_check_branch
      %23 = sbr.rel (0) target = $region17
    $region16: #{tpu_custom_call.1} parent=1 // pred_region
      %25 = vsyncadd [#allocation3], 0
      %s26 = sshll.u32 %s3, 4
      %s27 = int_to_ptr.hbm [resolvable:$true] %s26
      %s28 = sshll.u32 [#allocation2], 4
      %s29 = int_to_ptr.vmem [resolvable:$true] %s28
      %34 = dma.hbm_to_vmem [thread:$0]  %s27, 512, %s29, [#allocation3], 128, 128, 8
    $region17: #{tpu_custom_call.1} parent=1 // pred_fallthru
      _
    // Predicated region
    $region18: #{tpu_custom_call.1} parent=1 // pred_check
      _
    $region19: #{tpu_custom_call.1} parent=1 // pred_check_branch
      %36 = sbr.rel (0) target = $region21
    $region20: #{tpu_custom_call.1} parent=1 // pred_region
      %38 = vsyncadd [#allocation6], 0
      %s39 = sshll.u32 %s4, 4
      %s40 = int_to_ptr.hbm [resolvable:$true] %s39
      %s41 = sshll.u32 [#allocation5], 4
      %s42 = int_to_ptr.vmem [resolvable:$true] %s41
      %47 = dma.hbm_to_vmem [thread:$0]  %s40, 512, %s42, [#allocation6], 128, 128, 8
    $region21: #{tpu_custom_call.1} parent=1 // pred_fallthru
      _
    // Predicated region
    $region22: #{tpu_custom_call.1} parent=1 // pred_check
      _
    $region23: #{tpu_custom_call.1} parent=1 // pred_check_branch
      %49 = sbr.rel (0) target = $region25
    $region24: #{tpu_custom_call.1} parent=1 // pred_region
      _
    $region25: #{tpu_custom_call.1} parent=1 // pred_fallthru
      _
    // Predicated region
    $region26: #{tpu_custom_call.1} parent=1 // pred_check
      _
    $region27: #{tpu_custom_call.1} parent=1 // pred_check_branch
      %51 = sbr.rel (0) target = $region29
    $region28: #{tpu_custom_call.1} parent=1 // pred_region
      %53 = vsyncadd [#allocation6], 0
      %s54 = sshll.u32 %s6, 4
      %s55 = int_to_ptr.hbm [resolvable:$true] %s54
      %s56 = sshll.u32 [#allocation7], 4
      %s57 = int_to_ptr.vmem [resolvable:$true] %s56
      %62 = dma.hbm_to_vmem [thread:$0]  %s55, 512, %s57, [#allocation6], 128, 128, 8
    $region29: #{tpu_custom_call.1} parent=1 // pred_fallthru
      _
    // Predicated region
    $region30: #{tpu_custom_call.1} parent=1 // pred_check
      _
    $region31: #{tpu_custom_call.1} parent=1 // pred_check_branch
      %64 = sbr.rel (0) target = $region33
    $region32: #{tpu_custom_call.1} parent=1 // pred_region
      _
    $region33: #{tpu_custom_call.1} parent=1 // pred_fallthru
      _
    // Predicated region
    $region34: #{tpu_custom_call.1} parent=1 // pred_check
      _
    $region35: #{tpu_custom_call.1} parent=1 // pred_check_branch
      %66 = sbr.rel (0) target = $region37
    $region36: #{tpu_custom_call.1} parent=1 // pred_region
      %68 = dma.done [#allocation3], 512
    $region37: #{tpu_custom_call.1} parent=1 // pred_fallthru
      _
    // Predicated region
    $region38: #{tpu_custom_call.1} parent=1 // pred_check
      _
    $region39: #{tpu_custom_call.1} parent=1 // pred_check_branch
      %70 = sbr.rel (0) target = $region41
    $region40: #{tpu_custom_call.1} parent=1 // pred_region
      %72 = dma.done [#allocation6], 512
    $region41: #{tpu_custom_call.1} parent=1 // pred_fallthru
      _
    // Predicated region
    $region42: #{tpu_custom_call.1} parent=1 // pred_check
      _
    $region43: #{tpu_custom_call.1} parent=1 // pred_check_branch
      %74 = sbr.rel (0) target = $region45
    $region44: #{tpu_custom_call.1} parent=1 // pred_region
      %76 = dma.done [#allocation6], 512
    $region45: #{tpu_custom_call.1} parent=1 // pred_fallthru
      _
    %v77 = vld [vmem:[%s0] sm:$0xff]
    %v78 = vld [vmem:[%s1] sm:$0xf]
    %v79 = vld [vmem:[%s2] sm:$0x1]
    %v81 = vperm.slane %v79, 0
    %vm83 = vcmask 31744
    %v85 = vsel %vm83, %v77, 0
    %vm87 = vcmask 1043456
    %v89 = vsel %vm87, %v78, 0
    %91 = vmatpush.msra.mxu0 0.0
    %92 = vmatpush.msra.mxu0 0.0
    %93 = vmatpush.msra.mxu0 0.0
    %94 = vmatpush.msra.mxu0 0.0
    %95 = vmatpush.msra.mxu0 0.0
    %96 = vmatpush.msra.mxu0 0.0
    %97 = vmatpush.msra.mxu0 0.0
    %98 = vmatpush.msra.mxu0 0.0
    %99 = vmatpush.msra.mxu0 0.0
    %100 = vmatpush.msra.mxu0 0.0
    %101 = vmatpush.msra.mxu0 0.0
    %102 = vmatpush.msra.mxu0 0.0
    %103 = vmatpush.msra.mxu0 0.0
    %104 = vmatpush.msra.mxu0 0.0
    %105 = vmatpush.msra.mxu0 0.0
    %106 = vmatpush.msra.mxu0 %v89
    %107 = vmatmul.f32.gmra.mxu0 %v85
    %v108 = vpop.f32.mrf.mxu0
    %v109 = vadd.f32 %v81, %v108
    %110 = vdwg.mxu0
    %v111 = vxor.u32 %v109, 2147483648
    %v112 = vmul.f32 %v111, 1.442695
    %v113 = vpow.pop %v112
    %v114 = vadd.f32 %v113, 1.0
    %v115 = vrcp.pop %v114
    %v116 = vmul.f32 %v114, %v115
    %v117 = vsub.f32 1.0, %v116
    %v118 = vmul.f32 %v115, %v117
    %v119 = vadd.f32 %v115, %v118
    %vm120 = vweird.f32 %v114
    %vm121 = vweird.f32 %v115
    %vm122 = vmor %vm120, %vm121
    %v123 = vsel %vm122, %v115, %v119
    %v124 = vand.u32 2147483647, %v114
    %vm125 = vcmp.eq.f32.partialorder %v124, 8.507059e+37
    %v126 = vand.u32 %v114, 2147483648
    %v127 = vor.u32 1.1754944e-38, %v126
    %v128 = vsel %vm125, %v127, %v123
    %v129 = vmul.f32 1.0, %v128
    %v130 = vtanh.pop %v109
    %132 = vrot.lane.b32.xlu0 %v130, 32
    %v133 = vpop.permute.xlu0 %132
    %v135 = vmul.f32 %v129, %v133
    %v136 = vtanh.pop %v135
    %138 = vrot.lane.b32.xlu0 %v136, 64
    %v139 = vpop.permute.xlu0 %138
    %v141 = vmul.f32 %v129, %v139
    %v142 = vld [vmem:[#allocation2] sm:$0xff]
    %v143 = vld [vmem:[#allocation2 + $0x8] sm:$0xff]
    %v144 = vld [vmem:[#allocation2 + $0x10] sm:$0xff]
    %v145 = vld [vmem:[#allocation2 + $0x18] sm:$0xff]
    %v146 = vld [vmem:[#allocation5] sm:$0xff]
    %v147 = vld [vmem:[#allocation5 + $0x8] sm:$0xff]
    %v148 = vld [vmem:[#allocation5 + $0x10] sm:$0xff]
    %v149 = vld [vmem:[#allocation5 + $0x18] sm:$0xff]
    %v150 = vld [vmem:[%s5] sm:$0x1]
    %v152 = vperm.slane %v150, 0
    %155 = vrot.lane.b32.xlu0 %v141, 64
    %v156 = vpop.permute.xlu0 %155
    %vm157 = vcmask 261120
    %v158 = vsel %vm157, %v156, 0
    %160 = vmatpush.msra.mxu0 0.0
    %161 = vmatpush.msra.mxu0 0.0
    %162 = vmatpush.msra.mxu0 0.0
    %163 = vmatpush.msra.mxu0 0.0
    %164 = vmatpush.msra.mxu0 0.0
    %165 = vmatpush.msra.mxu0 0.0
    %166 = vmatpush.msra.mxu0 0.0
    %167 = vmatpush.msra.mxu0 0.0
    %168 = vmatpush.msra.mxu0 0.0
    %169 = vmatpush.msra.mxu0 0.0
    %170 = vmatpush.msra.mxu0 0.0
    %171 = vmatpush.msra.mxu0 0.0
    %172 = vmatpush.msra.mxu0 %v145
    %173 = vmatpush.msra.mxu0 %v144
    %174 = vmatpush.msra.mxu0 %v143
    %175 = vmatpush.msra.mxu0 %v142
    %176 = vmatmul.f32.gmra.mxu0 %v158
    %v177 = vpop.f32.mrf.mxu0
    %v178 = vadd.f32 %v152, %v177
    %179 = vdwg.mxu0
    %v180 = vxor.u32 %v178, 2147483648
    %v181 = vmul.f32 %v180, 1.442695
    %v182 = vpow.pop %v181
    %v183 = vadd.f32 %v182, 1.0
    %v184 = vrcp.pop %v183
    %v185 = vmul.f32 %v183, %v184
    %v186 = vsub.f32 1.0, %v185
    %v187 = vmul.f32 %v184, %v186
    %v188 = vadd.f32 %v184, %v187
    %vm189 = vweird.f32 %v183
    %vm190 = vweird.f32 %v184
    %vm191 = vmor %vm189, %vm190
    %v192 = vsel %vm191, %v184, %v188
    %v193 = vand.u32 2147483647, %v183
    %vm194 = vcmp.eq.f32.partialorder %v193, 8.507059e+37
    %v195 = vand.u32 %v183, 2147483648
    %v196 = vor.u32 1.1754944e-38, %v195
    %v197 = vsel %vm194, %v196, %v192
    %v198 = vmul.f32 1.0, %v197
    %v199 = vtanh.pop %v178
    %201 = vrot.lane.b32.xlu0 %v135, 32
    %v202 = vpop.permute.xlu0 %201
    %v204 = vmul.f32 %v198, %v202
    %206 = vrot.lane.b32.xlu0 %v199, 32
    %v207 = vpop.permute.xlu0 %206
    %v209 = vmul.f32 %v198, %v207
    %211 = vrot.lane.b32.xlu0 %v209, 32
    %v212 = vpop.permute.xlu0 %211
    %v214 = vadd.f32 %v204, %v212
    %v215 = vtanh.pop %v214
    %217 = vrot.lane.b32.xlu0 %v215, 32
    %v218 = vpop.permute.xlu0 %217
    %v220 = vmul.f32 %v198, %v218
    %222 = vrot.lane.b32.xlu0 %v220, 64
    %v223 = vpop.permute.xlu0 %222
    %v224 = vsel %vm157, %v223, 0
    %226 = vmatpush.msra.mxu0 0.0
    %227 = vmatpush.msra.mxu0 0.0
    %228 = vmatpush.msra.mxu0 0.0
    %229 = vmatpush.msra.mxu0 0.0
    %230 = vmatpush.msra.mxu0 0.0
    %231 = vmatpush.msra.mxu0 0.0
    %232 = vmatpush.msra.mxu0 0.0
    %233 = vmatpush.msra.mxu0 0.0
    %234 = vmatpush.msra.mxu0 0.0
    %235 = vmatpush.msra.mxu0 0.0
    %236 = vmatpush.msra.mxu0 0.0
    %237 = vmatpush.msra.mxu0 0.0
    %238 = vmatpush.msra.mxu0 %v149
    %239 = vmatpush.msra.mxu0 %v148
    %240 = vmatpush.msra.mxu0 %v147
    %241 = vmatpush.msra.mxu0 %v146
    %242 = vmatmul.f32.gmra.mxu0 %v224
    %v243 = vpop.f32.mrf.mxu0
    %v244 = vadd.f32 %v152, %v243
    %245 = vdwg.mxu0
    %v246 = vxor.u32 %v244, 2147483648
    %v247 = vmul.f32 %v246, 1.442695
    %v248 = vpow.pop %v247
    %v249 = vadd.f32 %v248, 1.0
    %v250 = vrcp.pop %v249
    %v251 = vmul.f32 %v249, %v250
    %v252 = vsub.f32 1.0, %v251
    %v253 = vmul.f32 %v250, %v252
    %v254 = vadd.f32 %v250, %v253
    %vm255 = vweird.f32 %v249
    %vm256 = vweird.f32 %v250
    %vm257 = vmor %vm255, %vm256
    %v258 = vsel %vm257, %v250, %v254
    %v259 = vand.u32 2147483647, %v249
    %vm260 = vcmp.eq.f32.partialorder %v259, 8.507059e+37
    %v261 = vand.u32 %v249, 2147483648
    %v262 = vor.u32 1.1754944e-38, %v261
    %v263 = vsel %vm260, %v262, %v258
    %v264 = vmul.f32 1.0, %v263
    %v265 = vtanh.pop %v244
    %v266 = vmul.f32 %v264, %v214
    %268 = vrot.lane.b32.xlu0 %v265, 32
    %v269 = vpop.permute.xlu0 %268
    %v271 = vmul.f32 %v264, %v269
    %273 = vrot.lane.b32.xlu0 %v271, 32
    %v274 = vpop.permute.xlu0 %273
    %v276 = vadd.f32 %v266, %v274
    %v277 = vtanh.pop %v276
    %279 = vrot.lane.b32.xlu0 %v277, 32
    %v280 = vpop.permute.xlu0 %279
    %v282 = vmul.f32 %v264, %v280
    %284 = vrot.lane.b32.xlu0 %v282, 64
    %v285 = vpop.permute.xlu0 %284
    %v286 = vsel %vm157, %v285, 0
    %288 = vmatpush.msra.mxu0 0.0
    %289 = vmatpush.msra.mxu0 0.0
    %290 = vmatpush.msra.mxu0 0.0
    %291 = vmatpush.msra.mxu0 0.0
    %292 = vmatpush.msra.mxu0 0.0
    %293 = vmatpush.msra.mxu0 0.0
    %294 = vmatpush.msra.mxu0 0.0
    %295 = vmatpush.msra.mxu0 0.0
    %296 = vmatpush.msra.mxu0 0.0
    %297 = vmatpush.msra.mxu0 0.0
    %298 = vmatpush.msra.mxu0 0.0
    %299 = vmatpush.msra.mxu0 0.0
    %300 = vmatpush.msra.mxu0 %v149
    %301 = vmatpush.msra.mxu0 %v148
    %302 = vmatpush.msra.mxu0 %v147
    %303 = vmatpush.msra.mxu0 %v146
    %304 = vmatmul.f32.gmra.mxu0 %v286
    %v305 = vpop.f32.mrf.mxu0
    %v306 = vadd.f32 %v152, %v305
    %307 = vdwg.mxu0
    %v308 = vxor.u32 %v306, 2147483648
    %v309 = vmul.f32 %v308, 1.442695
    %v310 = vpow.pop %v309
    %v311 = vadd.f32 %v310, 1.0
    %v312 = vrcp.pop %v311
    %v313 = vmul.f32 %v311, %v312
    %v314 = vsub.f32 1.0, %v313
    %v315 = vmul.f32 %v312, %v314
    %v316 = vadd.f32 %v312, %v315
    %vm317 = vweird.f32 %v311
    %vm318 = vweird.f32 %v312
    %vm319 = vmor %vm317, %vm318
    %v320 = vsel %vm319, %v312, %v316
    %v321 = vand.u32 2147483647, %v311
    %vm322 = vcmp.eq.f32.partialorder %v321, 8.507059e+37
    %v323 = vand.u32 %v311, 2147483648
    %v324 = vor.u32 1.1754944e-38, %v323
    %v325 = vsel %vm322, %v324, %v320
    %v326 = vmul.f32 1.0, %v325
    %v327 = vtanh.pop %v306
    %v328 = vmul.f32 %v326, %v276
    %330 = vrot.lane.b32.xlu0 %v327, 32
    %v331 = vpop.permute.xlu0 %330
    %v333 = vmul.f32 %v326, %v331
    %335 = vrot.lane.b32.xlu0 %v333, 32
    %v336 = vpop.permute.xlu0 %335
    %v338 = vadd.f32 %v328, %v336
    %v339 = vtanh.pop %v338
    %341 = vrot.lane.b32.xlu0 %v339, 32
    %v342 = vpop.permute.xlu0 %341
    %v344 = vmul.f32 %v326, %v342
    %346 = vrot.lane.b32.xlu0 %v344, 64
    %v347 = vpop.permute.xlu0 %346
    %v348 = vsel %vm157, %v347, 0
    %350 = vmatpush.msra.mxu0 0.0
    %351 = vmatpush.msra.mxu0 0.0
    %352 = vmatpush.msra.mxu0 0.0
    %353 = vmatpush.msra.mxu0 0.0
    %354 = vmatpush.msra.mxu0 0.0
    %355 = vmatpush.msra.mxu0 0.0
    %356 = vmatpush.msra.mxu0 0.0
    %357 = vmatpush.msra.mxu0 0.0
    %358 = vmatpush.msra.mxu0 0.0
    %359 = vmatpush.msra.mxu0 0.0
    %360 = vmatpush.msra.mxu0 0.0
    %361 = vmatpush.msra.mxu0 0.0
    %362 = vmatpush.msra.mxu0 %v149
    %363 = vmatpush.msra.mxu0 %v148
    %364 = vmatpush.msra.mxu0 %v147
    %365 = vmatpush.msra.mxu0 %v146
    %366 = vmatmul.f32.gmra.mxu0 %v348
    %v367 = vpop.f32.mrf.mxu0
    %v368 = vadd.f32 %v152, %v367
    %369 = vdwg.mxu0
    %v370 = vxor.u32 %v368, 2147483648
    %v371 = vmul.f32 %v370, 1.442695
    %v372 = vpow.pop %v371
    %v373 = vadd.f32 %v372, 1.0
    %v374 = vrcp.pop %v373
    %v375 = vmul.f32 %v373, %v374
    %v376 = vsub.f32 1.0, %v375
    %v377 = vmul.f32 %v374, %v376
    %v378 = vadd.f32 %v374, %v377
    %vm379 = vweird.f32 %v373
    %vm380 = vweird.f32 %v374
    %vm381 = vmor %vm379, %vm380
    %v382 = vsel %vm381, %v374, %v378
    %v383 = vand.u32 2147483647, %v373
    %vm384 = vcmp.eq.f32.partialorder %v383, 8.507059e+37
    %v385 = vand.u32 %v373, 2147483648
    %v386 = vor.u32 1.1754944e-38, %v385
    %v387 = vsel %vm384, %v386, %v382
    %v388 = vmul.f32 1.0, %v387
    %v389 = vtanh.pop %v368
    %v390 = vmul.f32 %v388, %v338
    %392 = vrot.lane.b32.xlu0 %v389, 32
    %v393 = vpop.permute.xlu0 %392
    %v395 = vmul.f32 %v388, %v393
    %397 = vrot.lane.b32.xlu0 %v395, 32
    %v398 = vpop.permute.xlu0 %397
    %v400 = vadd.f32 %v390, %v398
    %v401 = vtanh.pop %v400
    %403 = vrot.lane.b32.xlu0 %v401, 32
    %v404 = vpop.permute.xlu0 %403
    %v406 = vmul.f32 %v388, %v404
    %408 = vrot.lane.b32.xlu0 %v406, 64
    %v409 = vpop.permute.xlu0 %408
    %v410 = vsel %vm157, %v409, 0
    %412 = vmatpush.msra.mxu0 0.0
    %413 = vmatpush.msra.mxu0 0.0
    %414 = vmatpush.msra.mxu0 0.0
    %415 = vmatpush.msra.mxu0 0.0
    %416 = vmatpush.msra.mxu0 0.0
    %417 = vmatpush.msra.mxu0 0.0
    %418 = vmatpush.msra.mxu0 0.0
    %419 = vmatpush.msra.mxu0 0.0
    %420 = vmatpush.msra.mxu0 0.0
    %421 = vmatpush.msra.mxu0 0.0
    %422 = vmatpush.msra.mxu0 0.0
    %423 = vmatpush.msra.mxu0 0.0
    %424 = vmatpush.msra.mxu0 %v149
    %425 = vmatpush.msra.mxu0 %v148
    %426 = vmatpush.msra.mxu0 %v147
    %427 = vmatpush.msra.mxu0 %v146
    %428 = vmatmul.f32.gmra.mxu0 %v410
    %v429 = vpop.f32.mrf.mxu0
    %v430 = vadd.f32 %v152, %v429
    %431 = vdwg.mxu0
    %v432 = vxor.u32 %v430, 2147483648
    %v433 = vmul.f32 %v432, 1.442695
    %v434 = vpow.pop %v433
    %v435 = vadd.f32 %v434, 1.0
    %v436 = vrcp.pop %v435
    %v437 = vmul.f32 %v435, %v436
    %v438 = vsub.f32 1.0, %v437
    %v439 = vmul.f32 %v436, %v438
    %v440 = vadd.f32 %v436, %v439
    %vm441 = vweird.f32 %v435
    %vm442 = vweird.f32 %v436
    %vm443 = vmor %vm441, %vm442
    %v444 = vsel %vm443, %v436, %v440
    %v445 = vand.u32 2147483647, %v435
    %vm446 = vcmp.eq.f32.partialorder %v445, 8.507059e+37
    %v447 = vand.u32 %v435, 2147483648
    %v448 = vor.u32 1.1754944e-38, %v447
    %v449 = vsel %vm446, %v448, %v444
    %v450 = vmul.f32 1.0, %v449
    %v451 = vtanh.pop %v430
    %v452 = vmul.f32 %v450, %v400
    %454 = vrot.lane.b32.xlu0 %v451, 32
    %v455 = vpop.permute.xlu0 %454
    %v457 = vmul.f32 %v450, %v455
    %459 = vrot.lane.b32.xlu0 %v457, 32
    %v460 = vpop.permute.xlu0 %459
    %v462 = vadd.f32 %v452, %v460
    %v463 = vtanh.pop %v462
    %465 = vrot.lane.b32.xlu0 %v463, 32
    %v466 = vpop.permute.xlu0 %465
    %v468 = vmul.f32 %v450, %v466
    %470 = vrot.lane.b32.xlu0 %v468, 64
    %v471 = vpop.permute.xlu0 %470
    %v472 = vsel %vm157, %v471, 0
    %474 = vmatpush.msra.mxu0 0.0
    %475 = vmatpush.msra.mxu0 0.0
    %476 = vmatpush.msra.mxu0 0.0
    %477 = vmatpush.msra.mxu0 0.0
    %478 = vmatpush.msra.mxu0 0.0
    %479 = vmatpush.msra.mxu0 0.0
    %480 = vmatpush.msra.mxu0 0.0
    %481 = vmatpush.msra.mxu0 0.0
    %482 = vmatpush.msra.mxu0 0.0
    %483 = vmatpush.msra.mxu0 0.0
    %484 = vmatpush.msra.mxu0 0.0
    %485 = vmatpush.msra.mxu0 0.0
    %486 = vmatpush.msra.mxu0 %v149
    %487 = vmatpush.msra.mxu0 %v148
    %488 = vmatpush.msra.mxu0 %v147
    %489 = vmatpush.msra.mxu0 %v146
    %490 = vmatmul.f32.gmra.mxu0 %v472
    %v491 = vpop.f32.mrf.mxu0
    %v492 = vadd.f32 %v152, %v491
    %493 = vdwg.mxu0
    %v494 = vxor.u32 %v492, 2147483648
    %v495 = vmul.f32 %v494, 1.442695
    %v496 = vpow.pop %v495
    %v497 = vadd.f32 %v496, 1.0
    %v498 = vrcp.pop %v497
    %v499 = vmul.f32 %v497, %v498
    %v500 = vsub.f32 1.0, %v499
    %v501 = vmul.f32 %v498, %v500
    %v502 = vadd.f32 %v498, %v501
    %vm503 = vweird.f32 %v497
    %vm504 = vweird.f32 %v498
    %vm505 = vmor %vm503, %vm504
    %v506 = vsel %vm505, %v498, %v502
    %v507 = vand.u32 2147483647, %v497
    %vm508 = vcmp.eq.f32.partialorder %v507, 8.507059e+37
    %v509 = vand.u32 %v497, 2147483648
    %v510 = vor.u32 1.1754944e-38, %v509
    %v511 = vsel %vm508, %v510, %v506
    %v512 = vmul.f32 1.0, %v511
    %v513 = vtanh.pop %v492
    %v514 = vmul.f32 %v512, %v462
    %516 = vrot.lane.b32.xlu0 %v513, 32
    %v517 = vpop.permute.xlu0 %516
    %v519 = vmul.f32 %v512, %v517
    %521 = vrot.lane.b32.xlu0 %v519, 32
    %v522 = vpop.permute.xlu0 %521
    %v524 = vadd.f32 %v514, %v522
    %v525 = vtanh.pop %v524
    %527 = vrot.lane.b32.xlu0 %v525, 32
    %v528 = vpop.permute.xlu0 %527
    %v530 = vmul.f32 %v512, %v528
    %532 = vrot.lane.b32.xlu0 %v530, 64
    %v533 = vpop.permute.xlu0 %532
    %v534 = vsel %vm157, %v533, 0
    %536 = vmatpush.msra.mxu0 0.0
    %537 = vmatpush.msra.mxu0 0.0
    %538 = vmatpush.msra.mxu0 0.0
    %539 = vmatpush.msra.mxu0 0.0
    %540 = vmatpush.msra.mxu0 0.0
    %541 = vmatpush.msra.mxu0 0.0
    %542 = vmatpush.msra.mxu0 0.0
    %543 = vmatpush.msra.mxu0 0.0
    %544 = vmatpush.msra.mxu0 0.0
    %545 = vmatpush.msra.mxu0 0.0
    %546 = vmatpush.msra.mxu0 0.0
    %547 = vmatpush.msra.mxu0 0.0
    %548 = vmatpush.msra.mxu0 %v149
    %549 = vmatpush.msra.mxu0 %v148
    %550 = vmatpush.msra.mxu0 %v147
    %551 = vmatpush.msra.mxu0 %v146
    %552 = vmatmul.f32.gmra.mxu0 %v534
    %v553 = vpop.f32.mrf.mxu0
    %v554 = vadd.f32 %v152, %v553
    %555 = vdwg.mxu0
    %v556 = vxor.u32 %v554, 2147483648
    %v557 = vmul.f32 %v556, 1.442695
    %v558 = vpow.pop %v557
    %v559 = vadd.f32 %v558, 1.0
    %v560 = vrcp.pop %v559
    %v561 = vmul.f32 %v559, %v560
    %v562 = vsub.f32 1.0, %v561
    %v563 = vmul.f32 %v560, %v562
    %v564 = vadd.f32 %v560, %v563
    %vm565 = vweird.f32 %v559
    %vm566 = vweird.f32 %v560
    %vm567 = vmor %vm565, %vm566
    %v568 = vsel %vm567, %v560, %v564
    %v569 = vand.u32 2147483647, %v559
    %vm570 = vcmp.eq.f32.partialorder %v569, 8.507059e+37
    %v571 = vand.u32 %v559, 2147483648
    %v572 = vor.u32 1.1754944e-38, %v571
    %v573 = vsel %vm570, %v572, %v568
    %v574 = vmul.f32 1.0, %v573
    %v575 = vtanh.pop %v554
    %v576 = vmul.f32 %v574, %v524
    %578 = vrot.lane.b32.xlu0 %v575, 32
    %v579 = vpop.permute.xlu0 %578
    %v581 = vmul.f32 %v574, %v579
    %583 = vrot.lane.b32.xlu0 %v581, 32
    %v584 = vpop.permute.xlu0 %583
    %v586 = vadd.f32 %v576, %v584
    %v587 = vtanh.pop %v586
    %589 = vrot.lane.b32.xlu0 %v587, 32
    %v590 = vpop.permute.xlu0 %589
    %v592 = vmul.f32 %v574, %v590
    %594 = vrot.lane.b32.xlu0 %v592, 64
    %v595 = vpop.permute.xlu0 %594
    %v596 = vsel %vm157, %v595, 0
    %598 = vmatpush.msra.mxu0 0.0
    %599 = vmatpush.msra.mxu0 0.0
    %600 = vmatpush.msra.mxu0 0.0
    %601 = vmatpush.msra.mxu0 0.0
    %602 = vmatpush.msra.mxu0 0.0
    %603 = vmatpush.msra.mxu0 0.0
    %604 = vmatpush.msra.mxu0 0.0
    %605 = vmatpush.msra.mxu0 0.0
    %606 = vmatpush.msra.mxu0 0.0
    %607 = vmatpush.msra.mxu0 0.0
    %608 = vmatpush.msra.mxu0 0.0
    %609 = vmatpush.msra.mxu0 0.0
    %610 = vmatpush.msra.mxu0 %v149
    %611 = vmatpush.msra.mxu0 %v148
    %612 = vmatpush.msra.mxu0 %v147
    %613 = vmatpush.msra.mxu0 %v146
    %614 = vmatmul.f32.gmra.mxu0 %v596
    %v615 = vpop.f32.mrf.mxu0
    %v616 = vadd.f32 %v152, %v615
    %617 = vdwg.mxu0
    %v618 = vxor.u32 %v616, 2147483648
    %v619 = vmul.f32 %v618, 1.442695
    %v620 = vpow.pop %v619
    %v621 = vadd.f32 %v620, 1.0
    %v622 = vrcp.pop %v621
    %v623 = vmul.f32 %v621, %v622
    %v624 = vsub.f32 1.0, %v623
    %v625 = vmul.f32 %v622, %v624
    %v626 = vadd.f32 %v622, %v625
    %vm627 = vweird.f32 %v621
    %vm628 = vweird.f32 %v622
    %vm629 = vmor %vm627, %vm628
    %v630 = vsel %vm629, %v622, %v626
    %v631 = vand.u32 2147483647, %v621
    %vm632 = vcmp.eq.f32.partialorder %v631, 8.507059e+37
    %v633 = vand.u32 %v621, 2147483648
    %v634 = vor.u32 1.1754944e-38, %v633
    %v635 = vsel %vm632, %v634, %v630
    %v636 = vmul.f32 1.0, %v635
    %v637 = vtanh.pop %v616
    %v638 = vmul.f32 %v636, %v586
    %640 = vrot.lane.b32.xlu0 %v637, 32
    %v641 = vpop.permute.xlu0 %640
    %v643 = vmul.f32 %v636, %v641
    %645 = vrot.lane.b32.xlu0 %v643, 32
    %v646 = vpop.permute.xlu0 %645
    %v648 = vadd.f32 %v638, %v646
    %v649 = vtanh.pop %v648
    %651 = vrot.lane.b32.xlu0 %v649, 32
    %v652 = vpop.permute.xlu0 %651
    %v654 = vmul.f32 %v636, %v652
    %v655 = vld [vmem:[#allocation7] sm:$0xff]
    %v656 = vld [vmem:[#allocation7 + $0x8] sm:$0xff]
    %v657 = vld [vmem:[#allocation7 + $0x10] sm:$0xff]
    %v658 = vld [vmem:[#allocation7 + $0x18] sm:$0xff]
    %v659 = vld [vmem:[%s7] sm:$0x1]
    %v661 = vperm.slane %v659, 0
    %664 = vrot.lane.b32.xlu0 %v654, 64
    %v665 = vpop.permute.xlu0 %664
    %v666 = vsel %vm157, %v665, 0
    %668 = vmatpush.msra.mxu0 0.0
    %669 = vmatpush.msra.mxu0 0.0
    %670 = vmatpush.msra.mxu0 0.0
    %671 = vmatpush.msra.mxu0 0.0
    %672 = vmatpush.msra.mxu0 0.0
    %673 = vmatpush.msra.mxu0 0.0
    %674 = vmatpush.msra.mxu0 0.0
    %675 = vmatpush.msra.mxu0 0.0
    %676 = vmatpush.msra.mxu0 0.0
    %677 = vmatpush.msra.mxu0 0.0
    %678 = vmatpush.msra.mxu0 0.0
    %679 = vmatpush.msra.mxu0 0.0
    %680 = vmatpush.msra.mxu0 %v658
    %681 = vmatpush.msra.mxu0 %v657
    %682 = vmatpush.msra.mxu0 %v656
    %683 = vmatpush.msra.mxu0 %v655
    %684 = vmatmul.f32.gmra.mxu0 %v224
    %v685 = vpop.f32.mrf.mxu0
    %v686 = vadd.f32 %v661, %v685
    %687 = vmatmul.f32.gmra.mxu0 %v286
    %v688 = vpop.f32.mrf.mxu0
    %v689 = vadd.f32 %v661, %v688
    %690 = vmatmul.f32.gmra.mxu0 %v348
    %v691 = vpop.f32.mrf.mxu0
    %v692 = vadd.f32 %v661, %v691
    %693 = vmatmul.f32.gmra.mxu0 %v410
    %v694 = vpop.f32.mrf.mxu0
    %v695 = vadd.f32 %v661, %v694
    %696 = vmatmul.f32.gmra.mxu0 %v472
    %v697 = vpop.f32.mrf.mxu0
    %v698 = vadd.f32 %v661, %v697
    %699 = vmatmul.f32.gmra.mxu0 %v534
    %v700 = vpop.f32.mrf.mxu0
    %v701 = vadd.f32 %v661, %v700
    %702 = vmatmul.f32.gmra.mxu0 %v596
    %v703 = vpop.f32.mrf.mxu0
    %v704 = vadd.f32 %v661, %v703
    %705 = vmatmul.f32.gmra.mxu0 %v666
    %v706 = vpop.f32.mrf.mxu0
    %v707 = vadd.f32 %v661, %v706
    %708 = vdwg.mxu0
    %709 = vst [vmem:[#allocation8] sm:$0xff] %v686
    %710 = vst [vmem:[#allocation8 + $0x8] sm:$0xff] %v689
    %711 = vst [vmem:[#allocation8 + $0x10] sm:$0xff] %v692
    %712 = vst [vmem:[#allocation8 + $0x18] sm:$0xff] %v695
    %713 = vst [vmem:[#allocation8 + $0x20] sm:$0xff] %v698
    %714 = vst [vmem:[#allocation8 + $0x28] sm:$0xff] %v701
    %715 = vst [vmem:[#allocation8 + $0x30] sm:$0xff] %v704
    %716 = vst [vmem:[#allocation8 + $0x38] sm:$0xff] %v707
    // Predicated region
    $region46: #{tpu_custom_call.1} parent=1 // pred_check
      _
    $region47: #{tpu_custom_call.1} parent=1 // pred_check_branch
      %718 = sbr.rel (0) target = $region49
    $region48: #{tpu_custom_call.1} parent=1 // pred_region
      %720 = vsyncadd [#allocation4], 0
      %s721 = sshll.u32 [#allocation8], 4
      %s722 = int_to_ptr.vmem [resolvable:$true] %s721
      %s723 = sshll.u32 %s8, 4
      %s724 = int_to_ptr.hbm [resolvable:$true] %s723
      %729 = dma.vmem_to_hbm [thread:$0]  %s722, 1024, %s724, [#allocation4], 128, 128, 8
    $region49: #{tpu_custom_call.1} parent=1 // pred_fallthru
      _
    // Predicated region
    $region50: #{tpu_custom_call.1} parent=1 // pred_check
      _
    $region51: #{tpu_custom_call.1} parent=1 // pred_check_branch
      %731 = sbr.rel (0) target = $region53
    $region52: #{tpu_custom_call.1} parent=1 // pred_region
      %733 = dma.done [#allocation4], 1024
    $region53: #{tpu_custom_call.1} parent=1 // pred_fallthru
      _
    %734 = vsyncpa [#allocation3], 1
    %735 = vsyncpa [#allocation6], 1
    %736 = vsyncpa [#allocation4], 1

</llo_original>
